<compile_context>
chip_gen: v7x
topology: tpu7x:2x2x1
jax: 0.10.0
libtpu: 0.0.40
codegen_flags: <defaults>
</compile_context>

<pallas_src>
import functools

import jax
import jax.numpy as jnp
from jax.experimental import pallas as pl
from jax.experimental.pallas import tpu as pltpu


H1, H2 = 200, 50          # original hidden sizes of the torch module
H1P, H2P = 256, 128       # lane-multiple padded hidden sizes
# Indices of the "ones" (bias-carrier) columns inside the padded dims.
ONE_H1, ONE_H2 = H1, H2   # 200 < 256, 50 < 128


def _round_up(n, m):
    return ((n + m - 1) // m) * m


def _default_relu_bf16():
    """bf16 ReLU is a win on v6e/v7x; v5e has no bf16 VALU -> keep f32."""
    try:
        kind = jax.devices()[0].device_kind.lower()
    except Exception:
        return False
    return "v5" not in kind


def critic_kernel(x_ref, u_ref, w1_ref, w2s_ref, w2a_ref, w3t_ref, o_ref,
                  *, relu_bf16):
    f32 = jnp.float32
    cdt = w1_ref.dtype                       # compute dtype (bf16)

    xb = x_ref[...].astype(cdt)              # (TB, SP)  — ones column carries b1
    ub = u_ref[...].astype(cdt)              # (TB, AP)

    # l1: h1 = relu(x @ W1 + b1)   (bias folded via ones column of x)
    h1 = jnp.dot(xb, w1_ref[...], preferred_element_type=f32)   # (TB, H1P)
    if relu_bf16:
        h1 = jnp.maximum(h1.astype(cdt), 0.0)     # packed bf16 ReLU (v6e/v7x)
    else:
        h1 = jnp.maximum(h1, 0.0).astype(cdt)     # f32 ReLU (v5e)

    # l2 on cat([h1, u]) == h1 @ W2_state + u @ W2_action (b2 folded via
    # the all-ones padded column of h1).
    h2 = jnp.dot(h1, w2s_ref[...], preferred_element_type=f32)  # (TB, H2P)
    h2 = h2 + jnp.dot(ub, w2a_ref[...], preferred_element_type=f32)

    # Switch to batch-on-lanes so the (1, TB) result is a lane-dense row.
    h2t = h2.T                                                   # (H2P, TB) f32
    if relu_bf16:
        h2t = jnp.maximum(h2t.astype(cdt), 0.0)
    else:
        h2t = jnp.maximum(h2t, 0.0).astype(cdt)

    # l3: (1, H2P) @ (H2P, TB) -> (1, TB)  (b3 folded via ones column of h2)
    out = jnp.dot(w3t_ref[...], h2t, preferred_element_type=f32)
    o_ref[...] = out.astype(o_ref.dtype)


@functools.partial(jax.jit, static_argnames=("tb", "relu_bf16"))
def _critic_call(x, u, params, *, tb, relu_bf16):
    w1p, w2sp, w2ap, w3tp = params
    B, S = x.shape
    A = u.shape[1]
    SP = w1p.shape[0]        # padded state dim (includes the ones column)
    AP = w2ap.shape[0]       # padded action dim

    # Batch tile: multiple of 128; cap so large batches get >= 4 grid steps
    # (both v7x TensorCores busy + DMA/compute overlap).
    b128 = _round_up(B, 128)
    quarter = _round_up(-(-b128 // 4), 128)
    TB = max(128, min(_round_up(tb, 128), quarter))
    B_pad = _round_up(B, TB)
    n_tiles = B_pad // TB

    # Zero-pad batch & feature dims (no transpose, no dtype cast, no bias
    # arrays).  Column S of x is the bias-carrier "ones" column.
    xp = jnp.zeros((B_pad, SP), jnp.float32).at[:B, :S].set(x).at[:, S].set(1.0)
    up = jnp.zeros((B_pad, AP), jnp.float32).at[:B, :A].set(u)

    kernel = functools.partial(critic_kernel, relu_bf16=relu_bf16)

    def resident(shape):
        # Constant block index -> fetched once, stays VMEM-resident.
        return pl.BlockSpec(shape, lambda i: (0, 0))

    out_t = pl.pallas_call(
        kernel,
        out_shape=jax.ShapeDtypeStruct((1, B_pad), jnp.float32),
        grid_spec=pltpu.PrefetchScalarGridSpec(
            num_scalar_prefetch=0,
            grid=(n_tiles,),
            in_specs=[
                pl.BlockSpec((TB, SP), lambda i: (i, 0)),   # x tile
                pl.BlockSpec((TB, AP), lambda i: (i, 0)),   # u tile
                resident(w1p.shape),
                resident(w2sp.shape),
                resident(w2ap.shape),
                resident(w3tp.shape),
            ],
            out_specs=pl.BlockSpec((1, TB), lambda i: (0, i)),
        ),
        compiler_params=pltpu.CompilerParams(
            dimension_semantics=("parallel",),      # shard batch tiles over TCs
            vmem_limit_bytes=32 * 1024 * 1024,      # explicit headroom (v5e)
        ),
    )(xp, up, w1p, w2sp, w2ap, w3tp)

    return out_t[0, :B].reshape(B, 1)


def op_ddpg_critic(x, u, params, *, tb=512, relu_bf16=None):
    """x: (B, state_dim) f32, u: (B, action_dim) f32 -> (B, 1) f32."""
    if relu_bf16 is None:
        relu_bf16 = _default_relu_bf16()
    return _critic_call(x, u, params, tb=tb, relu_bf16=bool(relu_bf16))


def init_params(key, state_dim, action_dim, *, compute_dtype=jnp.bfloat16):
    """nn.Linear-style init, packed (in, out), zero-padded, biases folded."""
    SP = _round_up(state_dim + 1, 16)    # +1 for the ones/bias column
    AP = _round_up(action_dim, 16)
    ks = jax.random.split(key, 6)

    def lin(kw, kb, fan_in, fan_out):
        bound = 1.0 / (fan_in ** 0.5)
        w = jax.random.uniform(kw, (fan_out, fan_in), jnp.float32, -bound, bound)
        b = jax.random.uniform(kb, (fan_out,), jnp.float32, -bound, bound)
        return w, b

    w1, b1 = lin(ks[0], ks[1], state_dim, H1)                  # l1
    w2, b2 = lin(ks[2], ks[3], H1 + action_dim, H2)            # l2 (on cat)
    w3, b3 = lin(ks[4], ks[5], H2, 1)                          # l3

    one_x = state_dim   # ones column index in padded x

    # l1 weights (SP, H1P): b1 folded into the ones row; a 1.0 entry makes
    # h1[:, ONE_H1] == relu(1.0) == 1.0, which carries b2 into layer 2.
    w1p = (jnp.zeros((SP, H1P), jnp.float32)
           .at[:state_dim, :H1].set(w1.T)
           .at[one_x, :H1].set(b1)
           .at[one_x, ONE_H1].set(1.0))

    # l2 state-part weights (H1P, H2P): b2 folded into row ONE_H1; a 1.0 entry
    # makes h2[:, ONE_H2] == relu(1.0) == 1.0, which carries b3 into layer 3.
    w2sp = (jnp.zeros((H1P, H2P), jnp.float32)
            .at[:H1, :H2].set(w2[:, :H1].T)
            .at[ONE_H1, :H2].set(b2)
            .at[ONE_H1, ONE_H2].set(1.0))

    # l2 action-part weights (AP, H2P): padded rows/cols are zero so the
    # folded ones columns are untouched by the u branch.
    w2ap = (jnp.zeros((AP, H2P), jnp.float32)
            .at[:action_dim, :H2].set(w2[:, H1:].T))

    # l3 weights, transposed (1, H2P): b3 folded into column ONE_H2.
    w3tp = (jnp.zeros((1, H2P), jnp.float32)
            .at[0, :H2].set(w3[0])
            .at[0, ONE_H2].set(b3[0]))

    kernel_params = tuple(a.astype(compute_dtype) for a in (w1p, w2sp, w2ap, w3tp))
    raw_params = (w1, b1, w2, b2, w3, b3)
    return kernel_params, raw_params


def reference_mirror(x, u, kernel_params, *, relu_bf16):
    """Pure-JAX mirror of the kernel's exact math and cast points."""
    w1p, w2sp, w2ap, w3tp = kernel_params
    cdt = w1p.dtype
    B, S = x.shape
    A = u.shape[1]
    SP, AP = w1p.shape[0], w2ap.shape[0]
    xp = jnp.zeros((B, SP), jnp.float32).at[:, :S].set(x).at[:, S].set(1.0)
    up = jnp.zeros((B, AP), jnp.float32).at[:, :A].set(u)

    def relu_cast(h):
        if relu_bf16:
            return jnp.maximum(h.astype(cdt), 0.0)
        return jnp.maximum(h, 0.0).astype(cdt)

    h1 = relu_cast(jnp.dot(xp.astype(cdt), w1p, preferred_element_type=jnp.float32))
    h2 = jnp.dot(h1, w2sp, preferred_element_type=jnp.float32)
    h2 = h2 + jnp.dot(up.astype(cdt), w2ap, preferred_element_type=jnp.float32)
    h2 = relu_cast(h2)
    out = jnp.dot(h2, w3tp.T, preferred_element_type=jnp.float32)
    return out  # (B, 1)


def reference_f32(x, u, raw_params):
    """Exact torch-module math in float32 (no padding / folding / bf16)."""
    w1, b1, w2, b2, w3, b3 = raw_params
    h1 = jax.nn.relu(x @ w1.T + b1)
    h2 = jax.nn.relu(jnp.concatenate([h1, u], axis=1) @ w2.T + b2)
    return h2 @ w3.T + b3


if __name__ == "__main__":
    key = jax.random.PRNGKey(0)
    k_x, k_u, k_p = jax.random.split(key, 3)

    B, state_dim, action_dim = 8, 17, 6   # small mujoco-like shapes
    x = jax.random.normal(k_x, (B, state_dim), jnp.float32)
    u = jax.random.normal(k_u, (B, action_dim), jnp.float32)
    kparams, raw = init_params(k_p, state_dim, action_dim)
    relu_bf16 = _default_relu_bf16()

    out = jax.block_until_ready(op_ddpg_critic(x, u, kparams))
    ref_m = reference_mirror(x, u, kparams, relu_bf16=relu_bf16)
    ref_f = reference_f32(x, u, raw)
    assert out.shape == (B, 1)
    assert jnp.allclose(out, ref_m, atol=1e-3, rtol=1e-3), \
        float(jnp.max(jnp.abs(out - ref_m)))
    assert jnp.allclose(out, ref_f, atol=5e-2, rtol=5e-2), \
        float(jnp.max(jnp.abs(out - ref_f)))

    # Multi-tile + ragged batch path (B not a multiple of the tile size).
    B2 = 300
    x2 = jax.random.normal(k_x, (B2, state_dim), jnp.float32)
    u2 = jax.random.normal(k_u, (B2, action_dim), jnp.float32)
    out2 = jax.block_until_ready(op_ddpg_critic(x2, u2, kparams, tb=128))
    ref2_m = reference_mirror(x2, u2, kparams, relu_bf16=relu_bf16)
    ref2_f = reference_f32(x2, u2, raw)
    assert out2.shape == (B2, 1)
    assert jnp.allclose(out2, ref2_m, atol=1e-3, rtol=1e-3), \
        float(jnp.max(jnp.abs(out2 - ref2_m)))
    assert jnp.allclose(out2, ref2_f, atol=5e-2, rtol=5e-2), \
        float(jnp.max(jnp.abs(out2 - ref2_f)))

    print("KERNEL_OK")
</pallas_src>

<mosaic_0001>
module attributes {stable_mosaic.version = 11 : i64} {
  func.func @critic_kernel(%arg0: i32, %arg1: memref<128x32xf32, #tpu.memory_space<vmem>>, %arg2: memref<128x16xf32, #tpu.memory_space<vmem>>, %arg3: memref<32x256xbf16, #tpu.memory_space<vmem>>, %arg4: memref<256x128xbf16, #tpu.memory_space<vmem>>, %arg5: memref<16x128xbf16, #tpu.memory_space<vmem>>, %arg6: memref<1x128xbf16, #tpu.memory_space<vmem>>, %arg7: memref<1x128xf32, #tpu.memory_space<vmem>>) attributes {dimension_semantics = [#tpu.dimension_semantics<parallel>], iteration_bounds = array<i64: 1>, scalar_prefetch = 0 : i64, scratch_operands = 0 : i64, tpu.core_type = #tpu.core_type<tc>, window_params = [{transform_indices = @transform_0, window_bounds = array<i64: 128, 32>}, {transform_indices = @transform_1, window_bounds = array<i64: 128, 16>}, {pipeline_mode = #tpu.pipeline_mode<synchronous>, transform_indices = @transform_2, window_bounds = array<i64: 32, 256>}, {pipeline_mode = #tpu.pipeline_mode<synchronous>, transform_indices = @transform_3, window_bounds = array<i64: 256, 128>}, {pipeline_mode = #tpu.pipeline_mode<synchronous>, transform_indices = @transform_4, window_bounds = array<i64: 16, 128>}, {pipeline_mode = #tpu.pipeline_mode<synchronous>, transform_indices = @transform_5, window_bounds = array<i64: 1, 128>}, {transform_indices = @transform_6, window_bounds = array<i64: 1, 128>}]} {
    %c0 = arith.constant 0 : index
    %c0_0 = arith.constant 0 : index
    %0 = vector.load %arg1[%c0, %c0_0] : memref<128x32xf32, #tpu.memory_space<vmem>>, vector<128x32xf32>
    %1 = arith.truncf %0 : vector<128x32xf32> to vector<128x32xbf16>
    %c0_1 = arith.constant 0 : index
    %c0_2 = arith.constant 0 : index
    %2 = vector.load %arg2[%c0_1, %c0_2] : memref<128x16xf32, #tpu.memory_space<vmem>>, vector<128x16xf32>
    %3 = arith.truncf %2 : vector<128x16xf32> to vector<128x16xbf16>
    %c0_3 = arith.constant 0 : index
    %c0_4 = arith.constant 0 : index
    %4 = vector.load %arg3[%c0_3, %c0_4] : memref<32x256xbf16, #tpu.memory_space<vmem>>, vector<32x256xbf16>
    %cst = arith.constant dense<0.000000e+00> : vector<128x256xf32>
    %5 = tpu.matmul %1, %4, %cst {dimension_numbers = #tpu.dot_dimension_numbers<[1], [0], [0], [1], [0, 0, 1, 1], [], []>} : vector<128x32xbf16>, vector<32x256xbf16>, vector<128x256xf32> -> vector<128x256xf32>
    %6 = arith.truncf %5 : vector<128x256xf32> to vector<128x256xbf16>
    %cst_5 = arith.constant 0.000000e+00 : bf16
    %7 = vector.broadcast %cst_5 : bf16 to vector<128x256xbf16>
    %8 = arith.maximumf %6, %7 : vector<128x256xbf16>
    %c0_6 = arith.constant 0 : index
    %c0_7 = arith.constant 0 : index
    %9 = vector.load %arg4[%c0_6, %c0_7] : memref<256x128xbf16, #tpu.memory_space<vmem>>, vector<256x128xbf16>
    %cst_8 = arith.constant dense<0.000000e+00> : vector<128x128xf32>
    %10 = tpu.matmul %8, %9, %cst_8 {dimension_numbers = #tpu.dot_dimension_numbers<[1], [0], [0], [1], [0, 0, 1, 1], [], []>} : vector<128x256xbf16>, vector<256x128xbf16>, vector<128x128xf32> -> vector<128x128xf32>
    %c0_9 = arith.constant 0 : index
    %c0_10 = arith.constant 0 : index
    %11 = vector.load %arg5[%c0_9, %c0_10] : memref<16x128xbf16, #tpu.memory_space<vmem>>, vector<16x128xbf16>
    %cst_11 = arith.constant dense<0.000000e+00> : vector<128x128xf32>
    %12 = tpu.matmul %3, %11, %cst_11 {dimension_numbers = #tpu.dot_dimension_numbers<[1], [0], [0], [1], [0, 0, 1, 1], [], []>} : vector<128x16xbf16>, vector<16x128xbf16>, vector<128x128xf32> -> vector<128x128xf32>
    %13 = arith.addf %10, %12 : vector<128x128xf32>
    %14 = tpu.transpose %13, [1, 0] : vector<128x128xf32> -> vector<128x128xf32>
    %15 = arith.truncf %14 : vector<128x128xf32> to vector<128x128xbf16>
    %cst_12 = arith.constant 0.000000e+00 : bf16
    %16 = vector.broadcast %cst_12 : bf16 to vector<128x128xbf16>
    %17 = arith.maximumf %15, %16 : vector<128x128xbf16>
    %c0_13 = arith.constant 0 : index
    %c0_14 = arith.constant 0 : index
    %18 = vector.load %arg6[%c0_13, %c0_14] : memref<1x128xbf16, #tpu.memory_space<vmem>>, vector<1x128xbf16>
    %cst_15 = arith.constant dense<0.000000e+00> : vector<1x128xf32>
    %19 = tpu.matmul %18, %17, %cst_15 {dimension_numbers = #tpu.dot_dimension_numbers<[1], [0], [0], [1], [0, 0, 1, 1], [], []>} : vector<1x128xbf16>, vector<128x128xbf16>, vector<1x128xf32> -> vector<1x128xf32>
    %c0_16 = arith.constant 0 : index
    %c0_17 = arith.constant 0 : index
    %20 = vector.load %arg7[%c0_16, %c0_17] : memref<1x128xf32, #tpu.memory_space<vmem>>, vector<1x128xf32>
    tpu.vector_store %arg7[%c0_16, %c0_17], %19 {strides = array<i32>} : memref<1x128xf32, #tpu.memory_space<vmem>>, vector<1x128xf32>,
    return
  }
  func.func @transform_0(%arg0: i32) -> (i32, i32) {
    %c0_i32 = arith.constant 0 : i32
    %c0_i32_0 = arith.constant 0 : i32
    return %arg0, %c0_i32 : i32, i32
  }
  func.func @transform_1(%arg0: i32) -> (i32, i32) {
    %c0_i32 = arith.constant 0 : i32
    %c0_i32_0 = arith.constant 0 : i32
    return %arg0, %c0_i32 : i32, i32
  }
  func.func @transform_2(%arg0: i32) -> (i32, i32) {
    %c0_i32 = arith.constant 0 : i32
    %c0_i32_0 = arith.constant 0 : i32
    %c0_i32_1 = arith.constant 0 : i32
    return %c0_i32, %c0_i32_0 : i32, i32
  }
  func.func @transform_3(%arg0: i32) -> (i32, i32) {
    %c0_i32 = arith.constant 0 : i32
    %c0_i32_0 = arith.constant 0 : i32
    %c0_i32_1 = arith.constant 0 : i32
    return %c0_i32, %c0_i32_0 : i32, i32
  }
  func.func @transform_4(%arg0: i32) -> (i32, i32) {
    %c0_i32 = arith.constant 0 : i32
    %c0_i32_0 = arith.constant 0 : i32
    %c0_i32_1 = arith.constant 0 : i32
    return %c0_i32, %c0_i32_0 : i32, i32
  }
  func.func @transform_5(%arg0: i32) -> (i32, i32) {
    %c0_i32 = arith.constant 0 : i32
    %c0_i32_0 = arith.constant 0 : i32
    %c0_i32_1 = arith.constant 0 : i32
    return %c0_i32, %c0_i32_0 : i32, i32
  }
  func.func @transform_6(%arg0: i32) -> (i32, i32) {
    %c0_i32 = arith.constant 0 : i32
    %c0_i32_0 = arith.constant 0 : i32
    return %c0_i32, %arg0 : i32, i32
  }
}

</mosaic_0001>

<llo_original>
// kernel: _critic_call.1
$region0: #{_critic_call.1}
  #allocation0 [shape = 'u32[]', space=smem, size = 0x4, offset = 0x4, fixed_abs, tag = 'smem constant byte address 0x4 - core index']
  #allocation1 [shape = 'u32[144,128]{1,0:T(1,128)}', space=vmem, size = 0x12000, scoped, tag = 'internal scratch']
  %s0 = inlined_call_operand.vmem [shape: f32[128,32], index: 0, kind: input, shape index: {}]
  %s1 = inlined_call_operand.vmem [shape: f32[128,16], index: 1, kind: input, shape index: {}]
  %s2 = inlined_call_operand.vmem [shape: bf16[32,256], index: 2, kind: input, shape index: {}]
  %s3 = inlined_call_operand.vmem [shape: bf16[256,128], index: 3, kind: input, shape index: {}]
  %s4 = inlined_call_operand.vmem [shape: bf16[16,128], index: 4, kind: input, shape index: {}]
  %s5 = inlined_call_operand.vmem [shape: bf16[1,128], index: 5, kind: input, shape index: {}]
  %s6 = inlined_call_operand.vmem [shape: f32[1,128], index: 6, kind: output, shape index: {}]
  %s7 = sld [smem:[#allocation0]]
  $region34: #{_critic_call.1} parent=0
    _
  %s9 = ssub.s32 1, %s7
  %s10 = scalar_select 0, %s9, %s7
  // Predicated region
  $region2: #{_critic_call.1} parent=0 // pred_check
    _
  $region3: #{_critic_call.1} parent=0 // pred_check_branch
    %12 = sbr.rel (0) target = $region5
  $region4: #{_critic_call.1} parent=0 // pred_region
    _
  $region5: #{_critic_call.1} parent=0 // pred_fallthru
    _
  // Predicated region
  $region6: #{_critic_call.1} parent=0 // pred_check
    _
  $region7: #{_critic_call.1} parent=0 // pred_check_branch
    %14 = sbr.rel (0) target = $region9
  $region8: #{_critic_call.1} parent=0 // pred_region
    _
  $region9: #{_critic_call.1} parent=0 // pred_fallthru
    _
  // Predicated region
  $region10: #{_critic_call.1} parent=0 // pred_check
    _
  $region11: #{_critic_call.1} parent=0 // pred_check_branch
    %16 = sbr.rel (0) target = $region13
  $region12: #{_critic_call.1} parent=0 // pred_region
    _
  $region13: #{_critic_call.1} parent=0 // pred_fallthru
    _
  // Predicated region
  $region14: #{_critic_call.1} parent=0 // pred_check
    _
  $region15: #{_critic_call.1} parent=0 // pred_check_branch
    %18 = sbr.rel (0) target = $region17
  $region16: #{_critic_call.1} parent=0 // pred_region
    _
  $region17: #{_critic_call.1} parent=0 // pred_fallthru
    _
  // Predicated region
  $region18: #{_critic_call.1} parent=0 // pred_check
    _
  $region19: #{_critic_call.1} parent=0 // pred_check_branch
    %20 = sbr.rel (0) target = $region21
  $region20: #{_critic_call.1} parent=0 // pred_region
    _
  $region21: #{_critic_call.1} parent=0 // pred_fallthru
    _
  // Predicated region
  $region22: #{_critic_call.1} parent=0 // pred_check
    _
  $region23: #{_critic_call.1} parent=0 // pred_check_branch
    %22 = sbr.rel (0) target = $region25
  $region24: #{_critic_call.1} parent=0 // pred_region
    _
  $region25: #{_critic_call.1} parent=0 // pred_fallthru
    _
  %v24 = vld [vmem:[%s0] sm:$0xff]
  %v25 = vld [vmem:[%s0 + $0x8] sm:$0xff]
  %v26 = vld [vmem:[%s0 + $0x10] sm:$0xff]
  %v27 = vld [vmem:[%s0 + $0x18] sm:$0xff]
  %v28 = vld [vmem:[%s0 + $0x20] sm:$0xff]
  %v29 = vld [vmem:[%s0 + $0x28] sm:$0xff]
  %v30 = vld [vmem:[%s0 + $0x30] sm:$0xff]
  %v31 = vld [vmem:[%s0 + $0x38] sm:$0xff]
  %v32 = vld [vmem:[%s0 + $0x40] sm:$0xff]
  %v33 = vld [vmem:[%s0 + $0x48] sm:$0xff]
  %v34 = vld [vmem:[%s0 + $0x50] sm:$0xff]
  %v35 = vld [vmem:[%s0 + $0x58] sm:$0xff]
  %v36 = vld [vmem:[%s0 + $0x60] sm:$0xff]
  %v37 = vld [vmem:[%s0 + $0x68] sm:$0xff]
  %v38 = vld [vmem:[%s0 + $0x70] sm:$0xff]
  %v39 = vld [vmem:[%s0 + $0x78] sm:$0xff]
  %v40 = vpack.c.bf16 %v25, %v24
  %v41 = vpack.c.bf16 %v27, %v26
  %v42 = vpack.c.bf16 %v29, %v28
  %v43 = vpack.c.bf16 %v31, %v30
  %v44 = vpack.c.bf16 %v33, %v32
  %v45 = vpack.c.bf16 %v35, %v34
  %v46 = vpack.c.bf16 %v37, %v36
  %v47 = vpack.c.bf16 %v39, %v38
  %v48 = vld [vmem:[%s1] sm:$0xff]
  %v49 = vld [vmem:[%s1 + $0x8] sm:$0xff]
  %v50 = vld [vmem:[%s1 + $0x10] sm:$0xff]
  %v51 = vld [vmem:[%s1 + $0x18] sm:$0xff]
  %v52 = vld [vmem:[%s1 + $0x20] sm:$0xff]
  %v53 = vld [vmem:[%s1 + $0x28] sm:$0xff]
  %v54 = vld [vmem:[%s1 + $0x30] sm:$0xff]
  %v55 = vld [vmem:[%s1 + $0x38] sm:$0xff]
  %v56 = vld [vmem:[%s1 + $0x40] sm:$0xff]
  %v57 = vld [vmem:[%s1 + $0x48] sm:$0xff]
  %v58 = vld [vmem:[%s1 + $0x50] sm:$0xff]
  %v59 = vld [vmem:[%s1 + $0x58] sm:$0xff]
  %v60 = vld [vmem:[%s1 + $0x60] sm:$0xff]
  %v61 = vld [vmem:[%s1 + $0x68] sm:$0xff]
  %v62 = vld [vmem:[%s1 + $0x70] sm:$0xff]
  %v63 = vld [vmem:[%s1 + $0x78] sm:$0xff]
  %v64 = vpack.c.bf16 %v49, %v48
  %v65 = vpack.c.bf16 %v51, %v50
  %v66 = vpack.c.bf16 %v53, %v52
  %v67 = vpack.c.bf16 %v55, %v54
  %v68 = vpack.c.bf16 %v57, %v56
  %v69 = vpack.c.bf16 %v59, %v58
  %v70 = vpack.c.bf16 %v61, %v60
  %v71 = vpack.c.bf16 %v63, %v62
  %v72 = vld [vmem:[%s2] sm:$0xff]
  %v73 = vld [vmem:[%s2 + $0x8] sm:$0xff]
  %v74 = vld [vmem:[%s2 + $0x10] sm:$0xff]
  %v75 = vld [vmem:[%s2 + $0x18] sm:$0xff]
  %v80 = vunpack.c.l.b16 %v72
  %v81 = vunpack.c.h.b16 %v72
  %v82 = vunpack.c.l.b16 %v73
  %v83 = vunpack.c.h.b16 %v73
  %v84 = vunpack.c.l.b16 %v74
  %v85 = vunpack.c.h.b16 %v74
  %v86 = vunpack.c.l.b16 %v75
  %v87 = vunpack.c.h.b16 %v75
  %v88 = vpack.c.b16 %v82, %v80
  %v89 = vpack.c.b16 %v83, %v81
  %v90 = vpack.c.b16 %v86, %v84
  %v91 = vpack.c.b16 %v87, %v85
  %vm96 = vcmask 261120
  %v98 = vsel %vm96, %v40, 0
  %v101 = vsel %vm96, %v41, 0
  %v104 = vsel %vm96, %v42, 0
  %v107 = vsel %vm96, %v43, 0
  %v110 = vsel %vm96, %v44, 0
  %v113 = vsel %vm96, %v45, 0
  %v116 = vsel %vm96, %v46, 0
  %v119 = vsel %vm96, %v47, 0
  %121 = vmatprep.subr.bf16.mxu0 %v89
  %122 = vmatpush1.bf16.msra.mxu0 %v88
  %123 = vmatprep.subr.bf16.mxu0 %v91
  %124 = vmatpush1.bf16.msra.mxu0 %v90
  %125 = vmatprep.subr.bf16.mxu0 0
  %126 = vmatpush1.bf16.msra.mxu0 0
  %127 = vmatprep.subr.bf16.mxu0 0
  %128 = vmatpush1.bf16.msra.mxu0 0
  %129 = vmatprep.subr.bf16.mxu0 0
  %130 = vmatpush1.bf16.msra.mxu0 0
  %131 = vmatprep.subr.bf16.mxu0 0
  %132 = vmatpush1.bf16.msra.mxu0 0
  %133 = vmatprep.subr.bf16.mxu0 0
  %134 = vmatpush1.bf16.msra.mxu0 0
  %135 = vmatprep.subr.bf16.mxu0 0
  %136 = vmatpush1.bf16.msra.mxu0 0
  %137 = vmatprep.subr.bf16.mxu0 0
  %138 = vmatpush1.bf16.msra.mxu0 0
  %139 = vmatprep.subr.bf16.mxu0 0
  %140 = vmatpush1.bf16.msra.mxu0 0
  %141 = vmatprep.subr.bf16.mxu0 0
  %142 = vmatpush1.bf16.msra.mxu0 0
  %143 = vmatprep.subr.bf16.mxu0 0
  %144 = vmatpush1.bf16.msra.mxu0 0
  %145 = vmatprep.subr.bf16.mxu0 0
  %146 = vmatpush1.bf16.msra.mxu0 0
  %147 = vmatprep.subr.bf16.mxu0 0
  %148 = vmatpush1.bf16.msra.mxu0 0
  %149 = vmatprep.subr.bf16.mxu0 0
  %150 = vmatpush1.bf16.msra.mxu0 0
  %151 = vmatprep.subr.bf16.mxu0 0
  %152 = vmatpush1.bf16.msra.mxu0 0
  %153 = vmatprep.mubr.bf16.mxu0 0
  %154 = vmatmul.mubr.bf16.gmra.mrb[0].mxu0 %v98
  %v155 = vpop.f32.mrb[0].mxu0
  %v156 = vadd.f32 0.0, %v155
  %v157 = vpop.f32.mrb[0].mxu0
  %v158 = vadd.f32 0.0, %v157
  %v159 = vpop.f32.mrb[0].mxu0
  %v160 = vadd.f32 0.0, %v159
  %v161 = vpop.f32.mrb[0].mxu0
  %v162 = vadd.f32 0.0, %v161
  %163 = vmatprep.mubr.bf16.mxu0 0
  %164 = vmatmul.mubr.bf16.gmra.mrb[0].mxu0 %v101
  %v165 = vpop.f32.mrb[0].mxu0
  %v166 = vadd.f32 0.0, %v165
  %v167 = vpop.f32.mrb[0].mxu0
  %v168 = vadd.f32 0.0, %v167
  %v169 = vpop.f32.mrb[0].mxu0
  %v170 = vadd.f32 0.0, %v169
  %v171 = vpop.f32.mrb[0].mxu0
  %v172 = vadd.f32 0.0, %v171
  %173 = vmatprep.mubr.bf16.mxu0 0
  %174 = vmatmul.mubr.bf16.gmra.mrb[0].mxu0 %v104
  %v175 = vpop.f32.mrb[0].mxu0
  %v176 = vadd.f32 0.0, %v175
  %v177 = vpop.f32.mrb[0].mxu0
  %v178 = vadd.f32 0.0, %v177
  %v179 = vpop.f32.mrb[0].mxu0
  %v180 = vadd.f32 0.0, %v179
  %v181 = vpop.f32.mrb[0].mxu0
  %v182 = vadd.f32 0.0, %v181
  %183 = vmatprep.mubr.bf16.mxu0 0
  %184 = vmatmul.mubr.bf16.gmra.mrb[0].mxu0 %v107
  %v185 = vpop.f32.mrb[0].mxu0
  %v186 = vadd.f32 0.0, %v185
  %v187 = vpop.f32.mrb[0].mxu0
  %v188 = vadd.f32 0.0, %v187
  %v189 = vpop.f32.mrb[0].mxu0
  %v190 = vadd.f32 0.0, %v189
  %v191 = vpop.f32.mrb[0].mxu0
  %v192 = vadd.f32 0.0, %v191
  %193 = vmatprep.mubr.bf16.mxu0 0
  %194 = vmatmul.mubr.bf16.gmra.mrb[0].mxu0 %v110
  %v195 = vpop.f32.mrb[0].mxu0
  %v196 = vadd.f32 0.0, %v195
  %v197 = vpop.f32.mrb[0].mxu0
  %v198 = vadd.f32 0.0, %v197
  %v199 = vpop.f32.mrb[0].mxu0
  %v200 = vadd.f32 0.0, %v199
  %v201 = vpop.f32.mrb[0].mxu0
  %v202 = vadd.f32 0.0, %v201
  %203 = vmatprep.mubr.bf16.mxu0 0
  %204 = vmatmul.mubr.bf16.gmra.mrb[0].mxu0 %v113
  %v205 = vpop.f32.mrb[0].mxu0
  %v206 = vadd.f32 0.0, %v205
  %v207 = vpop.f32.mrb[0].mxu0
  %v208 = vadd.f32 0.0, %v207
  %v209 = vpop.f32.mrb[0].mxu0
  %v210 = vadd.f32 0.0, %v209
  %v211 = vpop.f32.mrb[0].mxu0
  %v212 = vadd.f32 0.0, %v211
  %213 = vmatprep.mubr.bf16.mxu0 0
  %214 = vmatmul.mubr.bf16.gmra.mrb[0].mxu0 %v116
  %v215 = vpop.f32.mrb[0].mxu0
  %v216 = vadd.f32 0.0, %v215
  %v217 = vpop.f32.mrb[0].mxu0
  %v218 = vadd.f32 0.0, %v217
  %v219 = vpop.f32.mrb[0].mxu0
  %v220 = vadd.f32 0.0, %v219
  %v221 = vpop.f32.mrb[0].mxu0
  %v222 = vadd.f32 0.0, %v221
  %223 = vmatprep.mubr.bf16.mxu0 0
  %224 = vmatmul.mubr.bf16.gmra.mrb[0].mxu0 %v119
  %v225 = vpop.f32.mrb[0].mxu0
  %v226 = vadd.f32 0.0, %v225
  %v227 = vpop.f32.mrb[0].mxu0
  %v228 = vadd.f32 0.0, %v227
  %v229 = vpop.f32.mrb[0].mxu0
  %v230 = vadd.f32 0.0, %v229
  %v231 = vpop.f32.mrb[0].mxu0
  %v232 = vadd.f32 0.0, %v231
  %233 = vdwg.mxu0
  %v234 = vpack.c.bf16 %v160, %v156
  %v235 = vpack.c.bf16 %v162, %v158
  %v236 = vpack.c.bf16 %v170, %v166
  %v237 = vpack.c.bf16 %v172, %v168
  %v238 = vpack.c.bf16 %v180, %v176
  %v239 = vpack.c.bf16 %v182, %v178
  %v240 = vpack.c.bf16 %v190, %v186
  %v241 = vpack.c.bf16 %v192, %v188
  %v242 = vpack.c.bf16 %v200, %v196
  %v243 = vpack.c.bf16 %v202, %v198
  %v244 = vpack.c.bf16 %v210, %v206
  %v245 = vpack.c.bf16 %v212, %v208
  %v246 = vpack.c.bf16 %v220, %v216
  %v247 = vpack.c.bf16 %v222, %v218
  %v248 = vpack.c.bf16 %v230, %v226
  %v249 = vpack.c.bf16 %v232, %v228
  %v250 = vmax.bf16 %v234, 0
  %v251 = vmax.bf16 %v235, 0
  %v252 = vmax.bf16 %v236, 0
  %v253 = vmax.bf16 %v237, 0
  %v254 = vmax.bf16 %v238, 0
  %v255 = vmax.bf16 %v239, 0
  %v256 = vmax.bf16 %v240, 0
  %v257 = vmax.bf16 %v241, 0
  %v258 = vmax.bf16 %v242, 0
  %v259 = vmax.bf16 %v243, 0
  %v260 = vmax.bf16 %v244, 0
  %v261 = vmax.bf16 %v245, 0
  %v262 = vmax.bf16 %v246, 0
  %v263 = vmax.bf16 %v247, 0
  %v264 = vmax.bf16 %v248, 0
  %v265 = vmax.bf16 %v249, 0
  %v266 = vld [vmem:[%s3] sm:$0xf]
  %v267 = vld [vmem:[%s3 + $0x4] sm:$0xf]
  %v268 = vld [vmem:[%s3 + $0x8] sm:$0xf]
  %v269 = vld [vmem:[%s3 + $0xc] sm:$0xf]
  %v270 = vld [vmem:[%s3 + $0x10] sm:$0xf]
  %v271 = vld [vmem:[%s3 + $0x14] sm:$0xf]
  %v272 = vld [vmem:[%s3 + $0x18] sm:$0xf]
  %v273 = vld [vmem:[%s3 + $0x1c] sm:$0xf]
  %v274 = vld [vmem:[%s3 + $0x20] sm:$0xf]
  %v275 = vld [vmem:[%s3 + $0x24] sm:$0xf]
  %v276 = vld [vmem:[%s3 + $0x28] sm:$0xf]
  %v277 = vld [vmem:[%s3 + $0x2c] sm:$0xf]
  %v278 = vld [vmem:[%s3 + $0x30] sm:$0xf]
  %v279 = vld [vmem:[%s3 + $0x34] sm:$0xf]
  %v280 = vld [vmem:[%s3 + $0x38] sm:$0xf]
  %v281 = vld [vmem:[%s3 + $0x3c] sm:$0xf]
  %v282 = vld [vmem:[%s3 + $0x40] sm:$0xf]
  %v283 = vld [vmem:[%s3 + $0x44] sm:$0xf]
  %v284 = vld [vmem:[%s3 + $0x48] sm:$0xf]
  %v285 = vld [vmem:[%s3 + $0x4c] sm:$0xf]
  %v286 = vld [vmem:[%s3 + $0x50] sm:$0xf]
  %v287 = vld [vmem:[%s3 + $0x54] sm:$0xf]
  %v288 = vld [vmem:[%s3 + $0x58] sm:$0xf]
  %v289 = vld [vmem:[%s3 + $0x5c] sm:$0xf]
  %v290 = vld [vmem:[%s3 + $0x60] sm:$0xf]
  %v291 = vld [vmem:[%s3 + $0x64] sm:$0xf]
  %v292 = vld [vmem:[%s3 + $0x68] sm:$0xf]
  %v293 = vld [vmem:[%s3 + $0x6c] sm:$0xf]
  %v294 = vld [vmem:[%s3 + $0x70] sm:$0xf]
  %v295 = vld [vmem:[%s3 + $0x74] sm:$0xf]
  %v296 = vld [vmem:[%s3 + $0x78] sm:$0xf]
  %v297 = vld [vmem:[%s3 + $0x7c] sm:$0xf]
  %v298 = vld [vmem:[%s4] sm:$0xf]
  %v299 = vld [vmem:[%s4 + $0x4] sm:$0xf]
  %v302 = vunpack.c.l.b16 %v298
  %v303 = vunpack.c.l.b16 %v299
  %v304 = vpack.c.b16 %v303, %v302
  %vm306 = vcmask 130048
  %v308 = vsel %vm306, %v64, 0
  %v311 = vsel %vm306, %v65, 0
  %v314 = vsel %vm306, %v66, 0
  %v317 = vsel %vm306, %v67, 0
  %v320 = vsel %vm306, %v68, 0
  %v323 = vsel %vm306, %v69, 0
  %v326 = vsel %vm306, %v70, 0
  %v329 = vsel %vm306, %v71, 0
  %331 = vmatprep.subr.bf16.mxu0 0
  %332 = vmatpush1.bf16.msra.mxu0 %v304
  %333 = vmatprep.subr.bf16.mxu0 0
  %334 = vmatpush1.bf16.msra.mxu0 0
  %335 = vmatprep.subr.bf16.mxu0 0
  %336 = vmatpush1.bf16.msra.mxu0 0
  %337 = vmatprep.subr.bf16.mxu0 0
  %338 = vmatpush1.bf16.msra.mxu0 0
  %339 = vmatprep.subr.bf16.mxu0 0
  %340 = vmatpush1.bf16.msra.mxu0 0
  %341 = vmatprep.subr.bf16.mxu0 0
  %342 = vmatpush1.bf16.msra.mxu0 0
  %343 = vmatprep.subr.bf16.mxu0 0
  %344 = vmatpush1.bf16.msra.mxu0 0
  %345 = vmatprep.subr.bf16.mxu0 0
  %346 = vmatpush1.bf16.msra.mxu0 0
  %347 = vmatprep.subr.bf16.mxu0 0
  %348 = vmatpush1.bf16.msra.mxu0 0
  %349 = vmatprep.subr.bf16.mxu0 0
  %350 = vmatpush1.bf16.msra.mxu0 0
  %351 = vmatprep.subr.bf16.mxu0 0
  %352 = vmatpush1.bf16.msra.mxu0 0
  %353 = vmatprep.subr.bf16.mxu0 0
  %354 = vmatpush1.bf16.msra.mxu0 0
  %355 = vmatprep.subr.bf16.mxu0 0
  %356 = vmatpush1.bf16.msra.mxu0 0
  %357 = vmatprep.subr.bf16.mxu0 0
  %358 = vmatpush1.bf16.msra.mxu0 0
  %359 = vmatprep.subr.bf16.mxu0 0
  %360 = vmatpush1.bf16.msra.mxu0 0
  %361 = vmatprep.subr.bf16.mxu0 0
  %362 = vmatpush1.bf16.msra.mxu0 0
  %363 = vmatprep.mubr.bf16.mxu0 0
  %364 = vmatmul.mubr.bf16.gmra.mrb[0].mxu0 %v308
  %v365 = vpop.f32.mrb[0].mxu0
  %v366 = vadd.f32 0.0, %v365
  %v367 = vpop.f32.mrb[0].mxu0
  %v368 = vpop.f32.mrb[0].mxu0
  %v369 = vadd.f32 0.0, %v368
  %v370 = vpop.f32.mrb[0].mxu0
  %371 = vmatprep.mubr.bf16.mxu0 0
  %372 = vmatmul.mubr.bf16.gmra.mrb[0].mxu0 %v311
  %v373 = vpop.f32.mrb[0].mxu0
  %v374 = vadd.f32 0.0, %v373
  %v375 = vpop.f32.mrb[0].mxu0
  %v376 = vpop.f32.mrb[0].mxu0
  %v377 = vadd.f32 0.0, %v376
  %v378 = vpop.f32.mrb[0].mxu0
  %379 = vmatprep.mubr.bf16.mxu0 0
  %380 = vmatmul.mubr.bf16.gmra.mrb[0].mxu0 %v314
  %v381 = vpop.f32.mrb[0].mxu0
  %v382 = vadd.f32 0.0, %v381
  %v383 = vpop.f32.mrb[0].mxu0
  %v384 = vpop.f32.mrb[0].mxu0
  %v385 = vadd.f32 0.0, %v384
  %v386 = vpop.f32.mrb[0].mxu0
  %387 = vmatprep.mubr.bf16.mxu0 0
  %388 = vmatmul.mubr.bf16.gmra.mrb[0].mxu0 %v317
  %v389 = vpop.f32.mrb[0].mxu0
  %v390 = vadd.f32 0.0, %v389
  %v391 = vpop.f32.mrb[0].mxu0
  %v392 = vpop.f32.mrb[0].mxu0
  %v393 = vadd.f32 0.0, %v392
  %v394 = vpop.f32.mrb[0].mxu0
  %395 = vmatprep.mubr.bf16.mxu0 0
  %396 = vmatmul.mubr.bf16.gmra.mrb[0].mxu0 %v320
  %v397 = vpop.f32.mrb[0].mxu0
  %v398 = vadd.f32 0.0, %v397
  %v399 = vpop.f32.mrb[0].mxu0
  %v400 = vpop.f32.mrb[0].mxu0
  %v401 = vadd.f32 0.0, %v400
  %v402 = vpop.f32.mrb[0].mxu0
  %403 = vmatprep.mubr.bf16.mxu0 0
  %404 = vmatmul.mubr.bf16.gmra.mrb[0].mxu0 %v323
  %v405 = vpop.f32.mrb[0].mxu0
  %v406 = vadd.f32 0.0, %v405
  %v407 = vpop.f32.mrb[0].mxu0
  %v408 = vpop.f32.mrb[0].mxu0
  %v409 = vadd.f32 0.0, %v408
  %v410 = vpop.f32.mrb[0].mxu0
  %411 = vmatprep.mubr.bf16.mxu0 0
  %412 = vmatmul.mubr.bf16.gmra.mrb[0].mxu0 %v326
  %v413 = vpop.f32.mrb[0].mxu0
  %v414 = vadd.f32 0.0, %v413
  %v415 = vpop.f32.mrb[0].mxu0
  %v416 = vpop.f32.mrb[0].mxu0
  %v417 = vadd.f32 0.0, %v416
  %v418 = vpop.f32.mrb[0].mxu0
  %419 = vmatprep.mubr.bf16.mxu0 0
  %420 = vmatmul.mubr.bf16.gmra.mrb[0].mxu0 %v329
  %v421 = vpop.f32.mrb[0].mxu0
  %v422 = vadd.f32 0.0, %v421
  %v423 = vpop.f32.mrb[0].mxu0
  %v424 = vpop.f32.mrb[0].mxu0
  %v425 = vadd.f32 0.0, %v424
  %v426 = vpop.f32.mrb[0].mxu0
  %427 = vdwg.mxu0
  %v460 = vunpack.c.l.b16 %v266
  %v461 = vunpack.c.l.b16 %v267
  %v462 = vunpack.c.l.b16 %v268
  %v463 = vunpack.c.l.b16 %v269
  %v464 = vunpack.c.l.b16 %v270
  %v465 = vunpack.c.l.b16 %v271
  %v466 = vunpack.c.l.b16 %v272
  %v467 = vunpack.c.l.b16 %v273
  %v468 = vunpack.c.l.b16 %v274
  %v469 = vunpack.c.l.b16 %v275
  %v470 = vunpack.c.l.b16 %v276
  %v471 = vunpack.c.l.b16 %v277
  %v472 = vunpack.c.l.b16 %v278
  %v473 = vunpack.c.l.b16 %v279
  %v474 = vunpack.c.l.b16 %v280
  %v475 = vunpack.c.l.b16 %v281
  %v476 = vunpack.c.l.b16 %v282
  %v477 = vunpack.c.l.b16 %v283
  %v478 = vunpack.c.l.b16 %v284
  %v479 = vunpack.c.l.b16 %v285
  %v480 = vunpack.c.l.b16 %v286
  %v481 = vunpack.c.l.b16 %v287
  %v482 = vunpack.c.l.b16 %v288
  %v483 = vunpack.c.l.b16 %v289
  %v484 = vunpack.c.l.b16 %v290
  %v485 = vunpack.c.l.b16 %v291
  %v486 = vunpack.c.l.b16 %v292
  %v487 = vunpack.c.l.b16 %v293
  %v488 = vunpack.c.l.b16 %v294
  %v489 = vunpack.c.l.b16 %v295
  %v490 = vunpack.c.l.b16 %v296
  %v491 = vunpack.c.l.b16 %v297
  %v492 = vpack.c.b16 %v461, %v460
  %v493 = vpack.c.b16 %v463, %v462
  %v494 = vpack.c.b16 %v465, %v464
  %v495 = vpack.c.b16 %v467, %v466
  %v496 = vpack.c.b16 %v469, %v468
  %v497 = vpack.c.b16 %v471, %v470
  %v498 = vpack.c.b16 %v473, %v472
  %v499 = vpack.c.b16 %v475, %v474
  %v500 = vpack.c.b16 %v477, %v476
  %v501 = vpack.c.b16 %v479, %v478
  %v502 = vpack.c.b16 %v481, %v480
  %v503 = vpack.c.b16 %v483, %v482
  %v504 = vpack.c.b16 %v485, %v484
  %v505 = vpack.c.b16 %v487, %v486
  %v506 = vpack.c.b16 %v489, %v488
  %v507 = vpack.c.b16 %v491, %v490
  %524 = vmatprep.subr.bf16.mxu0 0
  %525 = vmatpush1.bf16.msra.mxu0 %v492
  %526 = vmatprep.subr.bf16.mxu0 0
  %527 = vmatpush1.bf16.msra.mxu0 %v493
  %528 = vmatprep.subr.bf16.mxu0 0
  %529 = vmatpush1.bf16.msra.mxu0 %v494
  %530 = vmatprep.subr.bf16.mxu0 0
  %531 = vmatpush1.bf16.msra.mxu0 %v495
  %532 = vmatprep.subr.bf16.mxu0 0
  %533 = vmatpush1.bf16.msra.mxu0 %v496
  %534 = vmatprep.subr.bf16.mxu0 0
  %535 = vmatpush1.bf16.msra.mxu0 %v497
  %536 = vmatprep.subr.bf16.mxu0 0
  %537 = vmatpush1.bf16.msra.mxu0 %v498
  %538 = vmatprep.subr.bf16.mxu0 0
  %539 = vmatpush1.bf16.msra.mxu0 %v499
  %540 = vmatprep.subr.bf16.mxu0 0
  %541 = vmatpush1.bf16.msra.mxu0 %v500
  %542 = vmatprep.subr.bf16.mxu0 0
  %543 = vmatpush1.bf16.msra.mxu0 %v501
  %544 = vmatprep.subr.bf16.mxu0 0
  %545 = vmatpush1.bf16.msra.mxu0 %v502
  %546 = vmatprep.subr.bf16.mxu0 0
  %547 = vmatpush1.bf16.msra.mxu0 %v503
  %548 = vmatprep.subr.bf16.mxu0 0
  %549 = vmatpush1.bf16.msra.mxu0 %v504
  %550 = vmatprep.subr.bf16.mxu0 0
  %551 = vmatpush1.bf16.msra.mxu0 %v505
  %552 = vmatprep.subr.bf16.mxu0 0
  %553 = vmatpush1.bf16.msra.mxu0 %v506
  %554 = vmatprep.subr.bf16.mxu0 0
  %555 = vmatpush1.bf16.msra.mxu0 %v507
  %556 = vmatprep.mubr.bf16.mxu0 %v251
  %557 = vmatmul.mubr.bf16.gmra.mrb[0].mxu0 %v250
  %v558 = vpop.f32.mrb[0].mxu0
  %v559 = vadd.f32 %v366, %v558
  %v560 = vpop.f32.mrb[0].mxu0
  %v561 = vpop.f32.mrb[0].mxu0
  %v562 = vadd.f32 %v369, %v561
  %v563 = vpop.f32.mrb[0].mxu0
  %564 = vmatprep.mubr.bf16.mxu0 %v253
  %565 = vmatmul.mubr.bf16.gmra.mrb[0].mxu0 %v252
  %v566 = vpop.f32.mrb[0].mxu0
  %v567 = vadd.f32 %v374, %v566
  %v568 = vpop.f32.mrb[0].mxu0
  %v569 = vpop.f32.mrb[0].mxu0
  %v570 = vadd.f32 %v377, %v569
  %v571 = vpop.f32.mrb[0].mxu0
  %572 = vmatprep.mubr.bf16.mxu0 %v255
  %573 = vmatmul.mubr.bf16.gmra.mrb[0].mxu0 %v254
  %v574 = vpop.f32.mrb[0].mxu0
  %v575 = vadd.f32 %v382, %v574
  %v576 = vpop.f32.mrb[0].mxu0
  %v577 = vpop.f32.mrb[0].mxu0
  %v578 = vadd.f32 %v385, %v577
  %v579 = vpop.f32.mrb[0].mxu0
  %580 = vmatprep.mubr.bf16.mxu0 %v257
  %581 = vmatmul.mubr.bf16.gmra.mrb[0].mxu0 %v256
  %v582 = vpop.f32.mrb[0].mxu0
  %v583 = vadd.f32 %v390, %v582
  %v584 = vpop.f32.mrb[0].mxu0
  %v585 = vpop.f32.mrb[0].mxu0
  %v586 = vadd.f32 %v393, %v585
  %v587 = vpop.f32.mrb[0].mxu0
  %588 = vmatprep.mubr.bf16.mxu0 %v259
  %589 = vmatmul.mubr.bf16.gmra.mrb[0].mxu0 %v258
  %v590 = vpop.f32.mrb[0].mxu0
  %v591 = vadd.f32 %v398, %v590
  %v592 = vpop.f32.mrb[0].mxu0
  %v593 = vpop.f32.mrb[0].mxu0
  %v594 = vadd.f32 %v401, %v593
  %v595 = vpop.f32.mrb[0].mxu0
  %596 = vmatprep.mubr.bf16.mxu0 %v261
  %597 = vmatmul.mubr.bf16.gmra.mrb[0].mxu0 %v260
  %v598 = vpop.f32.mrb[0].mxu0
  %v599 = vadd.f32 %v406, %v598
  %v600 = vpop.f32.mrb[0].mxu0
  %v601 = vpop.f32.mrb[0].mxu0
  %v602 = vadd.f32 %v409, %v601
  %v603 = vpop.f32.mrb[0].mxu0
  %604 = vmatprep.mubr.bf16.mxu0 %v263
  %605 = vmatmul.mubr.bf16.gmra.mrb[0].mxu0 %v262
  %v606 = vpop.f32.mrb[0].mxu0
  %v607 = vadd.f32 %v414, %v606
  %v608 = vpop.f32.mrb[0].mxu0
  %v609 = vpop.f32.mrb[0].mxu0
  %v610 = vadd.f32 %v417, %v609
  %v611 = vpop.f32.mrb[0].mxu0
  %612 = vmatprep.mubr.bf16.mxu0 %v265
  %613 = vmatmul.mubr.bf16.gmra.mrb[0].mxu0 %v264
  %v614 = vpop.f32.mrb[0].mxu0
  %v615 = vadd.f32 %v422, %v614
  %v616 = vpop.f32.mrb[0].mxu0
  %v617 = vpop.f32.mrb[0].mxu0
  %v618 = vadd.f32 %v425, %v617
  %v619 = vpop.f32.mrb[0].mxu0
  %620 = vdwg.mxu0
  %621 = vxpose.xlu0.b32.start [1/16] %v559, 128
  %622 = vxpose.xlu0.b32.cont [2/16] %v562, 128
  %623 = vxpose.xlu0.b32.cont [3/16] %v567, 128
  %624 = vxpose.xlu0.b32.cont [4/16] %v570, 128
  %625 = vxpose.xlu0.b32.cont [5/16] %v575, 128
  %626 = vxpose.xlu0.b32.cont [6/16] %v578, 128
  %627 = vxpose.xlu0.b32.cont [7/16] %v583, 128
  %628 = vxpose.xlu0.b32.cont [8/16] %v586, 128
  %629 = vxpose.xlu0.b32.cont [9/16] %v591, 128
  %630 = vxpose.xlu0.b32.cont [10/16] %v594, 128
  %631 = vxpose.xlu0.b32.cont [11/16] %v599, 128
  %632 = vxpose.xlu0.b32.cont [12/16] %v602, 128
  %633 = vxpose.xlu0.b32.cont [13/16] %v607, 128
  %634 = vxpose.xlu0.b32.cont [14/16] %v610, 128
  %635 = vxpose.xlu0.b32.cont [15/16] %v615, 128
  %636 = vxpose.xlu0.b32.end [16/16] %v618, 128
  %v637 = vpop.trf.xlu0
  %v638 = vpop.trf.xlu0
  %v639 = vpop.trf.xlu0
  %v640 = vpop.trf.xlu0
  %v641 = vpop.trf.xlu0
  %v642 = vpop.trf.xlu0
  %v643 = vpop.trf.xlu0
  %v644 = vpop.trf.xlu0
  %v645 = vpop.trf.xlu0
  %v646 = vpop.trf.xlu0
  %v647 = vpop.trf.xlu0
  %v648 = vpop.trf.xlu0
  %v649 = vpop.trf.xlu0
  %v650 = vpop.trf.xlu0
  %v651 = vpop.trf.xlu0
  %v652 = vpop.trf.xlu0
  %v653 = vpack.c.bf16 %v638, %v637
  %v654 = vpack.c.bf16 %v640, %v639
  %v655 = vpack.c.bf16 %v642, %v641
  %v656 = vpack.c.bf16 %v644, %v643
  %v657 = vpack.c.bf16 %v646, %v645
  %v658 = vpack.c.bf16 %v648, %v647
  %v659 = vpack.c.bf16 %v650, %v649
  %v660 = vpack.c.bf16 %v652, %v651
  %v661 = vmax.bf16 %v653, 0
  %v662 = vmax.bf16 %v654, 0
  %v663 = vmax.bf16 %v655, 0
  %v664 = vmax.bf16 %v656, 0
  %v665 = vmax.bf16 %v657, 0
  %v666 = vmax.bf16 %v658, 0
  %v667 = vmax.bf16 %v659, 0
  %v668 = vmax.bf16 %v660, 0
  %v669 = vld [vmem:[%s5] sm:$0x1]
  %670 = vmatprep.subr.bf16.mxu0 0
  %671 = vmatpush1.bf16.msra.mxu0 %v661
  %672 = vmatprep.subr.bf16.mxu0 0
  %673 = vmatpush1.bf16.msra.mxu0 %v662
  %674 = vmatprep.subr.bf16.mxu0 0
  %675 = vmatpush1.bf16.msra.mxu0 %v663
  %676 = vmatprep.subr.bf16.mxu0 0
  %677 = vmatpush1.bf16.msra.mxu0 %v664
  %678 = vmatprep.subr.bf16.mxu0 0
  %679 = vmatpush1.bf16.msra.mxu0 %v665
  %680 = vmatprep.subr.bf16.mxu0 0
  %681 = vmatpush1.bf16.msra.mxu0 %v666
  %682 = vmatprep.subr.bf16.mxu0 0
  %683 = vmatpush1.bf16.msra.mxu0 %v667
  %684 = vmatprep.subr.bf16.mxu0 0
  %685 = vmatpush1.bf16.msra.mxu0 %v668
  %686 = vmatprep.subr.bf16.mxu0 0
  %687 = vmatpush1.bf16.msra.mxu0 0
  %688 = vmatprep.subr.bf16.mxu0 0
  %689 = vmatpush1.bf16.msra.mxu0 0
  %690 = vmatprep.subr.bf16.mxu0 0
  %691 = vmatpush1.bf16.msra.mxu0 0
  %692 = vmatprep.subr.bf16.mxu0 0
  %693 = vmatpush1.bf16.msra.mxu0 0
  %694 = vmatprep.subr.bf16.mxu0 0
  %695 = vmatpush1.bf16.msra.mxu0 0
  %696 = vmatprep.subr.bf16.mxu0 0
  %697 = vmatpush1.bf16.msra.mxu0 0
  %698 = vmatprep.subr.bf16.mxu0 0
  %699 = vmatpush1.bf16.msra.mxu0 0
  %700 = vmatprep.subr.bf16.mxu0 0
  %701 = vmatpush1.bf16.msra.mxu0 0
  %702 = vmatprep.mubr.bf16.mxu0 0
  %703 = vmatmul.mubr.bf16.gmra.mrb[0].mxu0 %v669
  %v704 = vpop.f32.mrb[0].mxu0
  %v705 = vadd.f32 0.0, %v704
  %v706 = vpop.f32.mrb[0].mxu0
  %v707 = vpop.f32.mrb[0].mxu0
  %v708 = vpop.f32.mrb[0].mxu0
  %709 = vdwg.mxu0
  %710 = vst [vmem:[%s6] sm:$0x1] %v705
  // Predicated region
  $region26: #{_critic_call.1} parent=0 // pred_check
    _
  $region27: #{_critic_call.1} parent=0 // pred_check_branch
    %712 = sbr.rel (0) target = $region29
  $region28: #{_critic_call.1} parent=0 // pred_region
    _
  $region29: #{_critic_call.1} parent=0 // pred_fallthru
    _
  // Predicated region
  $region30: #{_critic_call.1} parent=0 // pred_check
    _
  $region31: #{_critic_call.1} parent=0 // pred_check_branch
    %714 = sbr.rel (0) target = $region33
  $region32: #{_critic_call.1} parent=0 // pred_region
    _
  $region33: #{_critic_call.1} parent=0 // pred_fallthru
    _

</llo_original>
